<compile_context>
chip_gen: v5e
topology: v5e:2x2
jax: 0.10.0
libtpu: 0.0.40
codegen_flags: <defaults>
</compile_context>

<pallas_src>
import jax
import jax.numpy as jnp
from jax.experimental import pallas as pl
from jax.experimental.pallas import tpu as pltpu


STATE_DIM = 8    # len(state_space) from the CARLA env; fixed for a synthetic run
H1 = 128
H2 = 32
OUT = 1


def _round_up(n: int, m: int) -> int:
    return ((n + m - 1) // m) * m


def _cdiv(a: int, b: int) -> int:
    return -(-a // b)


def _choose_tiling(B: int, block_rows: int):
    """Pick (btile, b_pad, n_tiles): btile multiple of 128, >=2 tiles for B>=256."""
    b128 = _round_up(max(B, 1), 128)
    block_rows = max(128, _round_up(int(block_rows), 128))
    n_tiles = _cdiv(b128, block_rows)
    if b128 >= 256:
        n_tiles = max(n_tiles, 2)          # feed both v7x TensorCores
    btile = _round_up(_cdiv(b128, n_tiles), 128)
    b_pad = btile * n_tiles                # padding < 128 rows per tile
    return btile, b_pad, n_tiles


def critic_kernel(x_ref, w1_ref, b1_ref, w2_ref, b2_ref, w3_ref, b3_ref, o_ref):
    """One batch tile (batch on lanes): MXU fc1 -> ReLU -> MXU fc2 -> ReLU -> VPU fc3."""
    # fc1: (H1, S) @ (S, btile) -> (H1, btile); bf16 operands, f32 accumulation.
    h1 = jnp.dot(w1_ref[...], x_ref[...], preferred_element_type=jnp.float32)
    h1 = jnp.maximum(h1 + b1_ref[...], 0.0)                       # bias bcast over lanes

    # fc2: (H2, H1) @ (H1, btile) -> (H2, btile); cast activations to MXU dtype.
    h2 = jnp.dot(w2_ref[...], h1.astype(w2_ref.dtype),
                 preferred_element_type=jnp.float32)
    h2 = jnp.maximum(h2 + b2_ref[...], 0.0)

    # fc3: 32 -> 1 as a VPU multiply + sublane reduce (M=1 MXU matmul is wasteful).
    v = jnp.sum(h2 * w3_ref[...], axis=0, keepdims=True) + b3_ref[...]   # (1, btile)
    o_ref[...] = v.astype(o_ref.dtype)                            # lane-dense store


def critic_forward(x, params, *, block_rows: int = 4096, use_bf16: bool = True):
    """x: (B, STATE_DIM) float -> (B, 1) float32."""
    w1, b1, w2, b2, w3, b3 = params        # PyTorch layout: w (out, in), b (out,)
    B, S = x.shape
    h1n = w1.shape[0]
    h2n = w2.shape[0]

    btile, b_pad, n_tiles = _choose_tiling(B, block_rows)

    mxu_dtype = jnp.bfloat16 if use_bf16 else jnp.float32

    # Feature-major input: (S, b_pad), batch on lanes; pad batch to the grid.
    x_t = x.astype(jnp.float32).T
    if b_pad != B:
        x_t = jnp.pad(x_t, ((0, 0), (0, b_pad - B)))
    x_t = x_t.astype(mxu_dtype)

    w1m = w1.astype(mxu_dtype)                                    # (H1, S)
    w2m = w2.astype(mxu_dtype)                                    # (H2, H1)
    b1c = b1.reshape(h1n, 1).astype(jnp.float32)
    b2c = b2.reshape(h2n, 1).astype(jnp.float32)
    w3c = w3.reshape(h2n, 1).astype(jnp.float32)                  # column for VPU reduce
    b3c = b3.reshape(1, 1).astype(jnp.float32)

    param_bytes = sum(int(p.size) * p.dtype.itemsize
                      for p in (w1m, b1c, w2m, b2c, w3c, b3c))
    cost = pl.CostEstimate(
        flops=2 * b_pad * (S * h1n + h1n * h2n + h2n),
        transcendentals=0,
        bytes_accessed=int(x_t.size) * x_t.dtype.itemsize + b_pad * 4 + param_bytes,
    )

    out = pl.pallas_call(
        critic_kernel,
        out_shape=jax.ShapeDtypeStruct((1, b_pad), jnp.float32),
        grid=(n_tiles,),
        in_specs=[
            pl.BlockSpec((S, btile), lambda i: (0, i)),           # x_t: tiled over batch
            pl.BlockSpec((h1n, S), lambda i: (0, 0)),             # W1 (VMEM-resident)
            pl.BlockSpec((h1n, 1), lambda i: (0, 0)),             # b1
            pl.BlockSpec((h2n, h1n), lambda i: (0, 0)),           # W2
            pl.BlockSpec((h2n, 1), lambda i: (0, 0)),             # b2
            pl.BlockSpec((h2n, 1), lambda i: (0, 0)),             # w3 (column)
            pl.BlockSpec((1, 1), lambda i: (0, 0)),               # b3
        ],
        out_specs=pl.BlockSpec((1, btile), lambda i: (0, i)),     # lane-dense output
        compiler_params=pltpu.CompilerParams(
            dimension_semantics=("parallel",),                    # shard tiles across TCs
            vmem_limit_bytes=32 << 20,                            # working set ~3 MiB
        ),
        cost_estimate=cost,
    )(x_t, w1m, b1c, w2m, b2c, w3c, b3c)

    return out[0, :B].reshape(B, 1)


def init_params(key):
    """nn.Linear-style init, PyTorch layout: W (out, in), b (out,)."""
    def linear(k, fan_in, fan_out):
        kw, kb = jax.random.split(k)
        bound = 1.0 / (fan_in ** 0.5)
        w = jax.random.uniform(kw, (fan_out, fan_in), jnp.float32, -bound, bound)
        b = jax.random.uniform(kb, (fan_out,), jnp.float32, -bound, bound)
        return w, b

    k1, k2, k3 = jax.random.split(key, 3)
    w1, b1 = linear(k1, STATE_DIM, H1)
    w2, b2 = linear(k2, H1, H2)
    w3, b3 = linear(k3, H2, OUT)
    return (w1, b1, w2, b2, w3, b3)


def critic_reference(x, params):
    """Pure-JAX (f32) reference of the PyTorch forward."""
    w1, b1, w2, b2, w3, b3 = params
    a1 = jnp.maximum(x @ w1.T + b1, 0.0)
    a2 = jnp.maximum(a1 @ w2.T + b2, 0.0)
    return a2 @ w3.T + b3


if __name__ == "__main__":
    key = jax.random.PRNGKey(0)
    k_params, k_x, k_x2 = jax.random.split(key, 3)
    params = init_params(k_params)

    # Small shape consistent with the module: batch=2, state_dim=8.
    x = jax.random.normal(k_x, (2, STATE_DIM), jnp.float32)
    value = jax.block_until_ready(critic_forward(x, params))
    ref = critic_reference(x, params)
    assert value.shape == (2, 1), value.shape
    assert jnp.allclose(value, ref, atol=2e-2, rtol=2e-2), (value, ref)

    # Larger batch: >=2 grid tiles (v7x megacore path) + batch padding.
    xb = jax.random.normal(k_x2, (300, STATE_DIM), jnp.float32)
    vb = jax.block_until_ready(critic_forward(xb, params))
    rb = critic_reference(xb, params)
    assert vb.shape == (300, 1), vb.shape
    assert jnp.allclose(vb, rb, atol=2e-2, rtol=2e-2)

    # f32 MXU-operand path with a small tile (exercises multi-step pipeline).
    vf = jax.block_until_ready(
        critic_forward(xb, params, block_rows=128, use_bf16=False))
    assert vf.shape == (300, 1), vf.shape
    assert jnp.allclose(vf, rb, atol=2e-2, rtol=2e-2)

    print("KERNEL_OK")
</pallas_src>

<mosaic_0001>
module attributes {stable_mosaic.version = 11 : i64} {
  func.func @critic_kernel(%arg0: i32, %arg1: memref<8x128xbf16, #tpu.memory_space<vmem>>, %arg2: memref<128x8xbf16, #tpu.memory_space<vmem>>, %arg3: memref<128x1xf32, #tpu.memory_space<vmem>>, %arg4: memref<32x128xbf16, #tpu.memory_space<vmem>>, %arg5: memref<32x1xf32, #tpu.memory_space<vmem>>, %arg6: memref<32x1xf32, #tpu.memory_space<vmem>>, %arg7: memref<1x1xf32, #tpu.memory_space<vmem>>, %arg8: memref<1x128xf32, #tpu.memory_space<vmem>>) attributes {dimension_semantics = [#tpu.dimension_semantics<parallel>], iteration_bounds = array<i64: 1>, scalar_prefetch = 0 : i64, scratch_operands = 0 : i64, tpu.core_type = #tpu.core_type<tc>, window_params = [{transform_indices = @transform_0, window_bounds = array<i64: 8, 128>}, {pipeline_mode = #tpu.pipeline_mode<synchronous>, transform_indices = @transform_1, window_bounds = array<i64: 128, 8>}, {pipeline_mode = #tpu.pipeline_mode<synchronous>, transform_indices = @transform_2, window_bounds = array<i64: 128, 1>}, {pipeline_mode = #tpu.pipeline_mode<synchronous>, transform_indices = @transform_3, window_bounds = array<i64: 32, 128>}, {pipeline_mode = #tpu.pipeline_mode<synchronous>, transform_indices = @transform_4, window_bounds = array<i64: 32, 1>}, {pipeline_mode = #tpu.pipeline_mode<synchronous>, transform_indices = @transform_5, window_bounds = array<i64: 32, 1>}, {pipeline_mode = #tpu.pipeline_mode<synchronous>, transform_indices = @transform_6, window_bounds = array<i64: 1, 1>}, {transform_indices = @transform_7, window_bounds = array<i64: 1, 128>}]} {
    %c0 = arith.constant 0 : index
    %c0_0 = arith.constant 0 : index
    %0 = vector.load %arg2[%c0, %c0_0] : memref<128x8xbf16, #tpu.memory_space<vmem>>, vector<128x8xbf16>
    %c0_1 = arith.constant 0 : index
    %c0_2 = arith.constant 0 : index
    %1 = vector.load %arg1[%c0_1, %c0_2] : memref<8x128xbf16, #tpu.memory_space<vmem>>, vector<8x128xbf16>
    %cst = arith.constant dense<0.000000e+00> : vector<128x128xf32>
    %2 = tpu.matmul %0, %1, %cst {dimension_numbers = #tpu.dot_dimension_numbers<[1], [0], [0], [1], [0, 0, 1, 1], [], []>} : vector<128x8xbf16>, vector<8x128xbf16>, vector<128x128xf32> -> vector<128x128xf32>
    %c0_3 = arith.constant 0 : index
    %c0_4 = arith.constant 0 : index
    %3 = vector.load %arg3[%c0_3, %c0_4] : memref<128x1xf32, #tpu.memory_space<vmem>>, vector<128x1xf32>
    %4 = vector.broadcast %3 : vector<128x1xf32> to vector<128x128xf32>
    %5 = arith.addf %2, %4 : vector<128x128xf32>
    %cst_5 = arith.constant 0.000000e+00 : f32
    %6 = vector.broadcast %cst_5 : f32 to vector<128x128xf32>
    %7 = arith.maximumf %5, %6 : vector<128x128xf32>
    %c0_6 = arith.constant 0 : index
    %c0_7 = arith.constant 0 : index
    %8 = vector.load %arg4[%c0_6, %c0_7] : memref<32x128xbf16, #tpu.memory_space<vmem>>, vector<32x128xbf16>
    %9 = arith.truncf %7 : vector<128x128xf32> to vector<128x128xbf16>
    %cst_8 = arith.constant dense<0.000000e+00> : vector<32x128xf32>
    %10 = tpu.matmul %8, %9, %cst_8 {dimension_numbers = #tpu.dot_dimension_numbers<[1], [0], [0], [1], [0, 0, 1, 1], [], []>} : vector<32x128xbf16>, vector<128x128xbf16>, vector<32x128xf32> -> vector<32x128xf32>
    %c0_9 = arith.constant 0 : index
    %c0_10 = arith.constant 0 : index
    %11 = vector.load %arg5[%c0_9, %c0_10] : memref<32x1xf32, #tpu.memory_space<vmem>>, vector<32x1xf32>
    %12 = vector.broadcast %11 : vector<32x1xf32> to vector<32x128xf32>
    %13 = arith.addf %10, %12 : vector<32x128xf32>
    %cst_11 = arith.constant 0.000000e+00 : f32
    %14 = vector.broadcast %cst_11 : f32 to vector<32x128xf32>
    %15 = arith.maximumf %13, %14 : vector<32x128xf32>
    %c0_12 = arith.constant 0 : index
    %c0_13 = arith.constant 0 : index
    %16 = vector.load %arg6[%c0_12, %c0_13] : memref<32x1xf32, #tpu.memory_space<vmem>>, vector<32x1xf32>
    %17 = vector.broadcast %16 : vector<32x1xf32> to vector<32x128xf32>
    %18 = arith.mulf %15, %17 : vector<32x128xf32>
    %cst_14 = arith.constant dense<0.000000e+00> : vector<128xf32>
    %19 = vector.multi_reduction <add>, %18, %cst_14 [0] : vector<32x128xf32> to vector<128xf32>
    %20 = vector.shape_cast %19 : vector<128xf32> to vector<1x128xf32>
    %c0_15 = arith.constant 0 : index
    %c0_16 = arith.constant 0 : index
    %21 = vector.load %arg7[%c0_15, %c0_16] : memref<1x1xf32, #tpu.memory_space<vmem>>, vector<1x1xf32>
    %22 = vector.broadcast %21 : vector<1x1xf32> to vector<1x128xf32>
    %23 = arith.addf %20, %22 : vector<1x128xf32>
    %c0_17 = arith.constant 0 : index
    %c0_18 = arith.constant 0 : index
    %24 = vector.load %arg8[%c0_17, %c0_18] : memref<1x128xf32, #tpu.memory_space<vmem>>, vector<1x128xf32>
    tpu.vector_store %arg8[%c0_17, %c0_18], %23 {strides = array<i32>} : memref<1x128xf32, #tpu.memory_space<vmem>>, vector<1x128xf32>,
    return
  }
  func.func @transform_0(%arg0: i32) -> (i32, i32) {
    %c0_i32 = arith.constant 0 : i32
    %c0_i32_0 = arith.constant 0 : i32
    return %c0_i32, %arg0 : i32, i32
  }
  func.func @transform_1(%arg0: i32) -> (i32, i32) {
    %c0_i32 = arith.constant 0 : i32
    %c0_i32_0 = arith.constant 0 : i32
    %c0_i32_1 = arith.constant 0 : i32
    return %c0_i32, %c0_i32_0 : i32, i32
  }
  func.func @transform_2(%arg0: i32) -> (i32, i32) {
    %c0_i32 = arith.constant 0 : i32
    %c0_i32_0 = arith.constant 0 : i32
    %c0_i32_1 = arith.constant 0 : i32
    return %c0_i32, %c0_i32_0 : i32, i32
  }
  func.func @transform_3(%arg0: i32) -> (i32, i32) {
    %c0_i32 = arith.constant 0 : i32
    %c0_i32_0 = arith.constant 0 : i32
    %c0_i32_1 = arith.constant 0 : i32
    return %c0_i32, %c0_i32_0 : i32, i32
  }
  func.func @transform_4(%arg0: i32) -> (i32, i32) {
    %c0_i32 = arith.constant 0 : i32
    %c0_i32_0 = arith.constant 0 : i32
    %c0_i32_1 = arith.constant 0 : i32
    return %c0_i32, %c0_i32_0 : i32, i32
  }
  func.func @transform_5(%arg0: i32) -> (i32, i32) {
    %c0_i32 = arith.constant 0 : i32
    %c0_i32_0 = arith.constant 0 : i32
    %c0_i32_1 = arith.constant 0 : i32
    return %c0_i32, %c0_i32_0 : i32, i32
  }
  func.func @transform_6(%arg0: i32) -> (i32, i32) {
    %c0_i32 = arith.constant 0 : i32
    %c0_i32_0 = arith.constant 0 : i32
    %c0_i32_1 = arith.constant 0 : i32
    return %c0_i32, %c0_i32_0 : i32, i32
  }
  func.func @transform_7(%arg0: i32) -> (i32, i32) {
    %c0_i32 = arith.constant 0 : i32
    %c0_i32_0 = arith.constant 0 : i32
    return %c0_i32, %arg0 : i32, i32
  }
}

</mosaic_0001>

<llo_original>
// kernel: tpu_custom_call.1
$region0: #{tpu_custom_call.1}
  #allocation0 [shape = 'u32[]', space=smem, size = 0x4, offset = 0x4, fixed_abs, tag = 'smem constant byte address 0x4 - core index']
  #allocation1 [shape = 'u32[72,128]{1,0:T(1,128)}', space=vmem, size = 0x9000, scoped, tag = 'internal scratch']
  #allocation2 [shape = 'f32[1,1]{1,0:T(1,128)S(1)}', space=vmem, size = 0x200, scoped, tag = 'scoped memory for tpu_custom_call.1']
  %s0 = inlined_call_operand.vmem [shape: bf16[8,128], index: 0, kind: input, shape index: {}]
  %s1 = inlined_call_operand.vmem [shape: bf16[128,8], index: 1, kind: input, shape index: {}]
  %s2 = inlined_call_operand.vmem [shape: f32[128,1], index: 2, kind: input, shape index: {}]
  %s3 = inlined_call_operand.vmem [shape: bf16[32,128], index: 3, kind: input, shape index: {}]
  %s4 = inlined_call_operand.vmem [shape: f32[32,1], index: 4, kind: input, shape index: {}]
  %s5 = inlined_call_operand.vmem [shape: f32[32,1], index: 5, kind: input, shape index: {}]
  %s6 = inlined_call_operand.<no memory space> [shape: f32[1,1], index: 6, kind: input, shape index: {}]
  %s7 = inlined_call_operand.hbm [shape: f32[1,128], index: 7, kind: output, shape index: {}]
  %s8 = sld [smem:[#allocation0]]
  $region38: #{tpu_custom_call.1} parent=0
    _
  %s10 = ssub.s32 1, %s8
  %s11 = scalar_select 0, %s10, %s8
  %v12 = vstv %s6
  %13 = vst [vmem:[#allocation2] sm:$0x1] %v12
  $region1: #{tpu_custom_call.1} parent=0
    #allocation3 [shape = 'u8[512]{0}', space=vmem, size = 0x400, scoped, tag = 'output window, operand 0, single buffered']
    #allocation4 [shape = 's32[1]{0}', space=sflag, size = 0x4, scoped, tag = 'scoped memory for tpu_custom_call.1']
    %14 = vsyncpa [#allocation4], 0
    // Predicated region
    $region2: #{tpu_custom_call.1} parent=1 // pred_check
      _
    $region3: #{tpu_custom_call.1} parent=1 // pred_check_branch
      %16 = sbr.rel (0) target = $region5
    $region4: #{tpu_custom_call.1} parent=1 // pred_region
      _
    $region5: #{tpu_custom_call.1} parent=1 // pred_fallthru
      _
    // Predicated region
    $region6: #{tpu_custom_call.1} parent=1 // pred_check
      _
    $region7: #{tpu_custom_call.1} parent=1 // pred_check_branch
      %18 = sbr.rel (0) target = $region9
    $region8: #{tpu_custom_call.1} parent=1 // pred_region
      _
    $region9: #{tpu_custom_call.1} parent=1 // pred_fallthru
      _
    // Predicated region
    $region10: #{tpu_custom_call.1} parent=1 // pred_check
      _
    $region11: #{tpu_custom_call.1} parent=1 // pred_check_branch
      %20 = sbr.rel (0) target = $region13
    $region12: #{tpu_custom_call.1} parent=1 // pred_region
      _
    $region13: #{tpu_custom_call.1} parent=1 // pred_fallthru
      _
    // Predicated region
    $region14: #{tpu_custom_call.1} parent=1 // pred_check
      _
    $region15: #{tpu_custom_call.1} parent=1 // pred_check_branch
      %22 = sbr.rel (0) target = $region17
    $region16: #{tpu_custom_call.1} parent=1 // pred_region
      _
    $region17: #{tpu_custom_call.1} parent=1 // pred_fallthru
      _
    // Predicated region
    $region18: #{tpu_custom_call.1} parent=1 // pred_check
      _
    $region19: #{tpu_custom_call.1} parent=1 // pred_check_branch
      %24 = sbr.rel (0) target = $region21
    $region20: #{tpu_custom_call.1} parent=1 // pred_region
      _
    $region21: #{tpu_custom_call.1} parent=1 // pred_fallthru
      _
    // Predicated region
    $region22: #{tpu_custom_call.1} parent=1 // pred_check
      _
    $region23: #{tpu_custom_call.1} parent=1 // pred_check_branch
      %26 = sbr.rel (0) target = $region25
    $region24: #{tpu_custom_call.1} parent=1 // pred_region
      _
    $region25: #{tpu_custom_call.1} parent=1 // pred_fallthru
      _
    // Predicated region
    $region26: #{tpu_custom_call.1} parent=1 // pred_check
      _
    $region27: #{tpu_custom_call.1} parent=1 // pred_check_branch
      %28 = sbr.rel (0) target = $region29
    $region28: #{tpu_custom_call.1} parent=1 // pred_region
      _
    $region29: #{tpu_custom_call.1} parent=1 // pred_fallthru
      _
    %v30 = vld [vmem:[%s1] sm:$0xf]
    %v31 = vld [vmem:[%s1 + $0x4] sm:$0xf]
    %v32 = vld [vmem:[%s1 + $0x8] sm:$0xf]
    %v33 = vld [vmem:[%s1 + $0xc] sm:$0xf]
    %v34 = vld [vmem:[%s1 + $0x10] sm:$0xf]
    %v35 = vld [vmem:[%s1 + $0x14] sm:$0xf]
    %v36 = vld [vmem:[%s1 + $0x18] sm:$0xf]
    %v37 = vld [vmem:[%s1 + $0x1c] sm:$0xf]
    %v38 = vld [vmem:[%s1 + $0x20] sm:$0xf]
    %v39 = vld [vmem:[%s1 + $0x24] sm:$0xf]
    %v40 = vld [vmem:[%s1 + $0x28] sm:$0xf]
    %v41 = vld [vmem:[%s1 + $0x2c] sm:$0xf]
    %v42 = vld [vmem:[%s1 + $0x30] sm:$0xf]
    %v43 = vld [vmem:[%s1 + $0x34] sm:$0xf]
    %v44 = vld [vmem:[%s1 + $0x38] sm:$0xf]
    %v45 = vld [vmem:[%s1 + $0x3c] sm:$0xf]
    %v46 = vld [vmem:[%s0] sm:$0xf]
    %v47 = vld [vmem:[%s2] sm:$0xff]
    %v48 = vld [vmem:[%s2 + $0x8] sm:$0xff]
    %v49 = vld [vmem:[%s2 + $0x10] sm:$0xff]
    %v50 = vld [vmem:[%s2 + $0x18] sm:$0xff]
    %v51 = vld [vmem:[%s2 + $0x20] sm:$0xff]
    %v52 = vld [vmem:[%s2 + $0x28] sm:$0xff]
    %v53 = vld [vmem:[%s2 + $0x30] sm:$0xff]
    %v54 = vld [vmem:[%s2 + $0x38] sm:$0xff]
    %v55 = vld [vmem:[%s2 + $0x40] sm:$0xff]
    %v56 = vld [vmem:[%s2 + $0x48] sm:$0xff]
    %v57 = vld [vmem:[%s2 + $0x50] sm:$0xff]
    %v58 = vld [vmem:[%s2 + $0x58] sm:$0xff]
    %v59 = vld [vmem:[%s2 + $0x60] sm:$0xff]
    %v60 = vld [vmem:[%s2 + $0x68] sm:$0xff]
    %v61 = vld [vmem:[%s2 + $0x70] sm:$0xff]
    %v62 = vld [vmem:[%s2 + $0x78] sm:$0xff]
    %64 = vset.pattern.permute.xlu0 0
    %65 = vperm.xlu0 %64, %v47
    %v66 = vpop.permute.xlu0 %65
    %69 = vset.pattern.permute.xlu0 0
    %70 = vperm.xlu0 %69, %v48
    %v71 = vpop.permute.xlu0 %70
    %74 = vset.pattern.permute.xlu0 0
    %75 = vperm.xlu0 %74, %v49
    %v76 = vpop.permute.xlu0 %75
    %79 = vset.pattern.permute.xlu0 0
    %80 = vperm.xlu0 %79, %v50
    %v81 = vpop.permute.xlu0 %80
    %84 = vset.pattern.permute.xlu0 0
    %85 = vperm.xlu0 %84, %v51
    %v86 = vpop.permute.xlu0 %85
    %89 = vset.pattern.permute.xlu0 0
    %90 = vperm.xlu0 %89, %v52
    %v91 = vpop.permute.xlu0 %90
    %94 = vset.pattern.permute.xlu0 0
    %95 = vperm.xlu0 %94, %v53
    %v96 = vpop.permute.xlu0 %95
    %99 = vset.pattern.permute.xlu0 0
    %100 = vperm.xlu0 %99, %v54
    %v101 = vpop.permute.xlu0 %100
    %104 = vset.pattern.permute.xlu0 0
    %105 = vperm.xlu0 %104, %v55
    %v106 = vpop.permute.xlu0 %105
    %109 = vset.pattern.permute.xlu0 0
    %110 = vperm.xlu0 %109, %v56
    %v111 = vpop.permute.xlu0 %110
    %114 = vset.pattern.permute.xlu0 0
    %115 = vperm.xlu0 %114, %v57
    %v116 = vpop.permute.xlu0 %115
    %119 = vset.pattern.permute.xlu0 0
    %120 = vperm.xlu0 %119, %v58
    %v121 = vpop.permute.xlu0 %120
    %124 = vset.pattern.permute.xlu0 0
    %125 = vperm.xlu0 %124, %v59
    %v126 = vpop.permute.xlu0 %125
    %129 = vset.pattern.permute.xlu0 0
    %130 = vperm.xlu0 %129, %v60
    %v131 = vpop.permute.xlu0 %130
    %134 = vset.pattern.permute.xlu0 0
    %135 = vperm.xlu0 %134, %v61
    %v136 = vpop.permute.xlu0 %135
    %139 = vset.pattern.permute.xlu0 0
    %140 = vperm.xlu0 %139, %v62
    %v141 = vpop.permute.xlu0 %140
    %v159 = vunpack.c.l.b16 %v30
    %v160 = vunpack.c.l.b16 %v31
    %v161 = vunpack.c.l.b16 %v32
    %v162 = vunpack.c.l.b16 %v33
    %v163 = vunpack.c.l.b16 %v34
    %v164 = vunpack.c.l.b16 %v35
    %v165 = vunpack.c.l.b16 %v36
    %v166 = vunpack.c.l.b16 %v37
    %v167 = vunpack.c.l.b16 %v38
    %v168 = vunpack.c.l.b16 %v39
    %v169 = vunpack.c.l.b16 %v40
    %v170 = vunpack.c.l.b16 %v41
    %v171 = vunpack.c.l.b16 %v42
    %v172 = vunpack.c.l.b16 %v43
    %v173 = vunpack.c.l.b16 %v44
    %v174 = vunpack.c.l.b16 %v45
    %v175 = vpack.c.b16 %v160, %v159
    %v176 = vpack.c.b16 %v162, %v161
    %v177 = vpack.c.b16 %v164, %v163
    %v178 = vpack.c.b16 %v166, %v165
    %v179 = vpack.c.b16 %v168, %v167
    %v180 = vpack.c.b16 %v170, %v169
    %v181 = vpack.c.b16 %v172, %v171
    %v182 = vpack.c.b16 %v174, %v173
    %vm183 = vcmask 64512
    %v185 = vsel %vm183, %v175, 0
    %v188 = vsel %vm183, %v176, 0
    %v191 = vsel %vm183, %v177, 0
    %v194 = vsel %vm183, %v178, 0
    %v197 = vsel %vm183, %v179, 0
    %v200 = vsel %vm183, %v180, 0
    %v203 = vsel %vm183, %v181, 0
    %v206 = vsel %vm183, %v182, 0
    %vm208 = vcmask 1043456
    %v210 = vsel %vm208, %v46, 0
    %212 = vmatpush.bf16.msra.mxu0 0
    %213 = vmatpush.bf16.msra.mxu0 0
    %214 = vmatpush.bf16.msra.mxu0 0
    %215 = vmatpush.bf16.msra.mxu0 0
    %216 = vmatpush.bf16.msra.mxu0 0
    %217 = vmatpush.bf16.msra.mxu0 0
    %218 = vmatpush.bf16.msra.mxu0 0
    %219 = vmatpush.bf16.msra.mxu0 %v210
    %220 = vmatmul.bf16.gmra.mxu0 %v185
    %v221 = vpop.f32.mrf.mxu0
    %v222 = vadd.f32 %v66, %v221
    %v223 = vpop.f32.mrf.mxu0
    %v224 = vadd.f32 %v71, %v223
    %225 = vmatmul.bf16.gmra.mxu0 %v188
    %v226 = vpop.f32.mrf.mxu0
    %v227 = vadd.f32 %v76, %v226
    %v228 = vpop.f32.mrf.mxu0
    %v229 = vadd.f32 %v81, %v228
    %230 = vmatmul.bf16.gmra.mxu0 %v191
    %v231 = vpop.f32.mrf.mxu0
    %v232 = vadd.f32 %v86, %v231
    %v233 = vpop.f32.mrf.mxu0
    %v234 = vadd.f32 %v91, %v233
    %235 = vmatmul.bf16.gmra.mxu0 %v194
    %v236 = vpop.f32.mrf.mxu0
    %v237 = vadd.f32 %v96, %v236
    %v238 = vpop.f32.mrf.mxu0
    %v239 = vadd.f32 %v101, %v238
    %240 = vmatmul.bf16.gmra.mxu0 %v197
    %v241 = vpop.f32.mrf.mxu0
    %v242 = vadd.f32 %v106, %v241
    %v243 = vpop.f32.mrf.mxu0
    %v244 = vadd.f32 %v111, %v243
    %245 = vmatmul.bf16.gmra.mxu0 %v200
    %v246 = vpop.f32.mrf.mxu0
    %v247 = vadd.f32 %v116, %v246
    %v248 = vpop.f32.mrf.mxu0
    %v249 = vadd.f32 %v121, %v248
    %250 = vmatmul.bf16.gmra.mxu0 %v203
    %v251 = vpop.f32.mrf.mxu0
    %v252 = vadd.f32 %v126, %v251
    %v253 = vpop.f32.mrf.mxu0
    %v254 = vadd.f32 %v131, %v253
    %255 = vmatmul.bf16.gmra.mxu0 %v206
    %v256 = vpop.f32.mrf.mxu0
    %v257 = vadd.f32 %v136, %v256
    %v258 = vpop.f32.mrf.mxu0
    %v259 = vadd.f32 %v141, %v258
    %260 = vdwg.mxu0
    %v261 = vmax.f32 %v222, 0.0
    %v262 = vmax.f32 %v224, 0.0
    %v263 = vmax.f32 %v227, 0.0
    %v264 = vmax.f32 %v229, 0.0
    %v265 = vmax.f32 %v232, 0.0
    %v266 = vmax.f32 %v234, 0.0
    %v267 = vmax.f32 %v237, 0.0
    %v268 = vmax.f32 %v239, 0.0
    %v269 = vmax.f32 %v242, 0.0
    %v270 = vmax.f32 %v244, 0.0
    %v271 = vmax.f32 %v247, 0.0
    %v272 = vmax.f32 %v249, 0.0
    %v273 = vmax.f32 %v252, 0.0
    %v274 = vmax.f32 %v254, 0.0
    %v275 = vmax.f32 %v257, 0.0
    %v276 = vmax.f32 %v259, 0.0
    %v277 = vld [vmem:[%s3] sm:$0xf]
    %v278 = vld [vmem:[%s3 + $0x4] sm:$0xf]
    %v279 = vld [vmem:[%s3 + $0x8] sm:$0xf]
    %v280 = vld [vmem:[%s3 + $0xc] sm:$0xf]
    %v281 = vpack.c.bf16 %v262, %v261
    %v282 = vpack.c.bf16 %v264, %v263
    %v283 = vpack.c.bf16 %v266, %v265
    %v284 = vpack.c.bf16 %v268, %v267
    %v285 = vpack.c.bf16 %v270, %v269
    %v286 = vpack.c.bf16 %v272, %v271
    %v287 = vpack.c.bf16 %v274, %v273
    %v288 = vpack.c.bf16 %v276, %v275
    %v289 = vld [vmem:[%s4] sm:$0xff]
    %v290 = vld [vmem:[%s4 + $0x8] sm:$0xff]
    %v291 = vld [vmem:[%s4 + $0x10] sm:$0xff]
    %v292 = vld [vmem:[%s4 + $0x18] sm:$0xff]
    %294 = vset.pattern.permute.xlu0 0
    %295 = vperm.xlu0 %294, %v289
    %v296 = vpop.permute.xlu0 %295
    %299 = vset.pattern.permute.xlu0 0
    %300 = vperm.xlu0 %299, %v290
    %v301 = vpop.permute.xlu0 %300
    %304 = vset.pattern.permute.xlu0 0
    %305 = vperm.xlu0 %304, %v291
    %v306 = vpop.permute.xlu0 %305
    %309 = vset.pattern.permute.xlu0 0
    %310 = vperm.xlu0 %309, %v292
    %v311 = vpop.permute.xlu0 %310
    %v317 = vunpack.c.l.b16 %v277
    %v318 = vunpack.c.l.b16 %v278
    %v319 = vunpack.c.l.b16 %v279
    %v320 = vunpack.c.l.b16 %v280
    %v321 = vpack.c.b16 %v318, %v317
    %v322 = vpack.c.b16 %v320, %v319
    %325 = vmatpush.bf16.msra.mxu0 %v288
    %326 = vmatpush.bf16.msra.mxu0 %v287
    %327 = vmatpush.bf16.msra.mxu0 %v286
    %328 = vmatpush.bf16.msra.mxu0 %v285
    %329 = vmatpush.bf16.msra.mxu0 %v284
    %330 = vmatpush.bf16.msra.mxu0 %v283
    %331 = vmatpush.bf16.msra.mxu0 %v282
    %332 = vmatpush.bf16.msra.mxu0 %v281
    %333 = vmatmul.bf16.gmra.mxu0 %v321
    %v334 = vpop.f32.mrf.mxu0
    %v335 = vadd.f32 %v296, %v334
    %v336 = vpop.f32.mrf.mxu0
    %v337 = vadd.f32 %v301, %v336
    %338 = vmatmul.bf16.gmra.mxu0 %v322
    %v339 = vpop.f32.mrf.mxu0
    %v340 = vadd.f32 %v306, %v339
    %v341 = vpop.f32.mrf.mxu0
    %v342 = vadd.f32 %v311, %v341
    %343 = vdwg.mxu0
    %v344 = vmax.f32 %v335, 0.0
    %v345 = vmax.f32 %v337, 0.0
    %v346 = vmax.f32 %v340, 0.0
    %v347 = vmax.f32 %v342, 0.0
    %v348 = vld [vmem:[%s5] sm:$0xff]
    %v349 = vld [vmem:[%s5 + $0x8] sm:$0xff]
    %v350 = vld [vmem:[%s5 + $0x10] sm:$0xff]
    %v351 = vld [vmem:[%s5 + $0x18] sm:$0xff]
    %353 = vset.pattern.permute.xlu0 0
    %354 = vperm.xlu0 %353, %v348
    %v355 = vpop.permute.xlu0 %354
    %358 = vset.pattern.permute.xlu0 0
    %359 = vperm.xlu0 %358, %v349
    %v360 = vpop.permute.xlu0 %359
    %363 = vset.pattern.permute.xlu0 0
    %364 = vperm.xlu0 %363, %v350
    %v365 = vpop.permute.xlu0 %364
    %368 = vset.pattern.permute.xlu0 0
    %369 = vperm.xlu0 %368, %v351
    %v370 = vpop.permute.xlu0 %369
    %v372 = vmul.f32 %v344, %v355
    %v373 = vmul.f32 %v345, %v360
    %v374 = vmul.f32 %v346, %v365
    %v375 = vmul.f32 %v347, %v370
    %v376 = vadd.f32 %v372, %v373
    %v377 = vadd.f32 %v376, %v374
    %v378 = vadd.f32 %v377, %v375
    %v379 = vrot.slane %v378, 4
    %v380 = vadd.f32 %v378, %v379
    %v381 = vrot.slane %v380, 2
    %v382 = vadd.f32 %v380, %v381
    %v383 = vrot.slane %v382, 1
    %v384 = vadd.f32 %v382, %v383
    %v385 = vld [vmem:[#allocation2] sm:$0x1]
    %387 = vset.pattern.permute.xlu0 0
    %388 = vperm.xlu0 %387, %v385
    %v389 = vpop.permute.xlu0 %388
    %v391 = vperm.slane %v389, 0
    %v392 = vadd.f32 %v384, %v391
    %393 = vst [vmem:[#allocation3] sm:$0x1] %v392
    // Predicated region
    $region30: #{tpu_custom_call.1} parent=1 // pred_check
      _
    $region31: #{tpu_custom_call.1} parent=1 // pred_check_branch
      %395 = sbr.rel (0) target = $region33
    $region32: #{tpu_custom_call.1} parent=1 // pred_region
      %397 = vsyncadd [#allocation4], 0
      %s399 = sshll.u32 [#allocation3], 4
      %s400 = int_to_ptr.vmem [resolvable:$true] %s399
      %s401 = sshll.u32 %s7, 4
      %s402 = int_to_ptr.hbm [resolvable:$true] %s401
      %404 = dma.vmem_to_hbm [thread:$0]  %s400, 16, %s402, [#allocation4]
    $region33: #{tpu_custom_call.1} parent=1 // pred_fallthru
      _
    // Predicated region
    $region34: #{tpu_custom_call.1} parent=1 // pred_check
      _
    $region35: #{tpu_custom_call.1} parent=1 // pred_check_branch
      %406 = sbr.rel (0) target = $region37
    $region36: #{tpu_custom_call.1} parent=1 // pred_region
      %408 = dma.done [#allocation4], 16
    $region37: #{tpu_custom_call.1} parent=1 // pred_fallthru
      _
    %409 = vsyncpa [#allocation4], 1

</llo_original>
